<compile_context>
chip_gen: v6e
topology: v6e:2x2x1
jax: 0.10.0
libtpu: 0.0.40
codegen_flags: <defaults>
</compile_context>

<pallas_src>
import functools

import jax
import jax.numpy as jnp
from jax import lax
from jax.experimental import pallas as pl
from jax.experimental.pallas import tpu as pltpu


def _layernorm_kernel(scale_ref, x_ref, o_ref, *, inv_dm1):
    # x_ref: (tm, d) tile of independent rows. All stats in f32.
    x = x_ref[...].astype(jnp.float32)
    mean = jnp.mean(x, axis=-1, keepdims=True)
    centered = x - mean
    # unbiased variance (Bessel correction) to match torch.Tensor.std
    var = jnp.sum(centered * centered, axis=-1, keepdims=True) * inv_dm1
    inv_std = lax.rsqrt(var)                      # per-row, EUP slot
    # scale = alpha * beta / eps  (folded in the wrapper, lives in SMEM)
    o_ref[...] = (centered * (scale_ref[0] * inv_std)).astype(o_ref.dtype)


def _round_up(x, m):
    return ((x + m - 1) // m) * m


@functools.partial(jax.jit, static_argnames=("eps", "target_tile_bytes"))
def layer_normalization(x, alpha, beta, *, eps=1e-6, target_tile_bytes=2 << 20):
    """Row-wise layer norm over the last dim of x (any leading shape)."""
    orig_shape = x.shape
    d = orig_shape[-1]
    m = 1
    for s in orig_shape[:-1]:
        m *= s
    x2d = x.reshape(m, d)

    itemsize = jnp.dtype(x.dtype).itemsize
    # Sublane multiple for packed dtypes: f32 -> 8, bf16 -> 16, int8/fp8 -> 32.
    if itemsize >= 4:
        sub = 8
    elif itemsize == 2:
        sub = 16
    else:
        sub = 32

    # Row tile from a byte budget over the f32 working set (d * 4 bytes/row),
    # rounded to the sublane multiple, clamped to the (rounded-up) array and
    # capped at 1024 rows.
    row_bytes_f32 = d * 4
    tm = max(sub, (target_tile_bytes // row_bytes_f32) // sub * sub)
    tm = min(tm, 1024, _round_up(m, sub))

    # Guarantee >=2 grid steps when possible so both v7x TensorCores get work.
    if pl.cdiv(m, tm) == 1 and tm > sub and m > sub:
        tm = max(sub, _round_up((tm + 1) // 2, sub))

    n_blocks = pl.cdiv(m, tm)

    # Fold alpha, beta and 1/eps into one scalar (SMEM).
    scale = (jnp.asarray(alpha, jnp.float32).reshape(-1)[0]
             * jnp.asarray(beta, jnp.float32).reshape(-1)[0]
             / jnp.float32(eps)).reshape(1)

    # TODO(synk): d == 1 keeps torch's NaN (0/0) semantics for unbiased std.
    inv_dm1 = 1.0 / float(max(d - 1, 1))
    kernel = functools.partial(_layernorm_kernel, inv_dm1=inv_dm1)

    cost = pl.CostEstimate(
        flops=7 * m * d,                 # sub, square, 2 reduces, 1 fused scale mul...
        transcendentals=m,               # one rsqrt per row
        bytes_accessed=2 * m * d * itemsize)

    # Double-buffered in + out tiles, plus the in-kernel f32 working set
    # (x_f32 + centered), plus headroom.  Cap at 40 MiB (fits v7x's 64 MiB).
    vmem_need = 4 * tm * d * itemsize + 2 * tm * d * 4 + (2 << 20)
    vmem_limit = min(max(vmem_need, 8 << 20), 40 << 20)

    out2d = pl.pallas_call(
        kernel,
        out_shape=jax.ShapeDtypeStruct((m, d), x.dtype),
        grid_spec=pltpu.PrefetchScalarGridSpec(
            num_scalar_prefetch=0,
            grid=(n_blocks,),
            in_specs=[
                pl.BlockSpec(memory_space=pltpu.MemorySpace.SMEM),  # scale (1,)
                pl.BlockSpec((tm, d), lambda i: (i, 0)),            # x rows
            ],
            out_specs=pl.BlockSpec((tm, d), lambda i: (i, 0)),
        ),
        compiler_params=pltpu.CompilerParams(
            dimension_semantics=("parallel",),
            vmem_limit_bytes=vmem_limit),
        cost_estimate=cost,
    )(scale, x2d)

    return out2d.reshape(orig_shape)


if __name__ == "__main__":
    # Lane-aligned last dim (128) so the test exercises the real
    # (unmasked, lane-dense) store path; M=16 -> 2 grid steps of 8 rows.
    batch, seq, d_model = 2, 8, 128
    eps = 1e-6

    key = jax.random.PRNGKey(0)
    x = jax.random.normal(key, (batch, seq, d_model), jnp.float32)

    # Parameters initialized exactly like the PyTorch module: ones(1).
    alpha = jnp.ones((1,), jnp.float32)
    beta = jnp.ones((1,), jnp.float32)

    out = layer_normalization(x, alpha, beta, eps=eps)
    out = jax.block_until_ready(out)

    # Plain-JAX reference with identical (torch) semantics.
    mean = jnp.mean(x, axis=-1, keepdims=True)
    var = jnp.sum((x - mean) ** 2, axis=-1, keepdims=True) / (d_model - 1)
    std = jnp.sqrt(var)
    ref = alpha[0] * (x - mean) / (std * eps) * beta[0]

    assert out.shape == x.shape
    # Values are ~1e6 in magnitude (division by std*eps), so relative tol;
    # small extra slack for the hardware rsqrt path.
    assert jnp.allclose(out, ref, rtol=1e-4, atol=1.0), float(
        jnp.max(jnp.abs(out - ref)))

    print("KERNEL_OK")
</pallas_src>

<mosaic_0001>
module attributes {stable_mosaic.version = 11 : i64} {
  func.func @_layernorm_kernel(%arg0: i32, %arg1: memref<1xf32, #tpu.memory_space<smem>>, %arg2: memref<8x128xf32, #tpu.memory_space<vmem>>, %arg3: memref<8x128xf32, #tpu.memory_space<vmem>>) attributes {dimension_semantics = [#tpu.dimension_semantics<parallel>], iteration_bounds = array<i64: 2>, scalar_prefetch = 0 : i64, scratch_operands = 0 : i64, tpu.core_type = #tpu.core_type<tc>, window_params = [{transform_indices = @transform_0, window_bounds = array<i64: 1>}, {transform_indices = @transform_1, window_bounds = array<i64: 8, 128>}, {transform_indices = @transform_2, window_bounds = array<i64: 8, 128>}]} {
    %c0 = arith.constant 0 : index
    %c0_0 = arith.constant 0 : index
    %0 = vector.load %arg2[%c0, %c0_0] : memref<8x128xf32, #tpu.memory_space<vmem>>, vector<8x128xf32>
    %cst = arith.constant dense<0.000000e+00> : vector<8xf32>
    %1 = vector.multi_reduction <add>, %0, %cst [1] : vector<8x128xf32> to vector<8xf32>
    %2 = vector.shape_cast %1 : vector<8xf32> to vector<8x1xf32>
    %cst_1 = arith.constant 1.280000e+02 : f32
    %3 = vector.broadcast %cst_1 : f32 to vector<8x1xf32>
    %4 = arith.divf %2, %3 : vector<8x1xf32>
    %5 = vector.broadcast %4 : vector<8x1xf32> to vector<8x128xf32>
    %6 = arith.subf %0, %5 : vector<8x128xf32>
    %7 = arith.mulf %6, %6 : vector<8x128xf32>
    %cst_2 = arith.constant dense<0.000000e+00> : vector<8xf32>
    %8 = vector.multi_reduction <add>, %7, %cst_2 [1] : vector<8x128xf32> to vector<8xf32>
    %9 = vector.shape_cast %8 : vector<8xf32> to vector<8x1xf32>
    %cst_3 = arith.constant 0.00787401571 : f32
    %10 = vector.broadcast %cst_3 : f32 to vector<8x1xf32>
    %11 = arith.mulf %9, %10 : vector<8x1xf32>
    %12 = math.rsqrt %11 : vector<8x1xf32>
    %c0_4 = arith.constant 0 : index
    %13 = memref.load %arg1[%c0_4] : memref<1xf32, #tpu.memory_space<smem>>
    %14 = vector.broadcast %13 : f32 to vector<8x1xf32>
    %15 = arith.mulf %14, %12 : vector<8x1xf32>
    %16 = vector.broadcast %15 : vector<8x1xf32> to vector<8x128xf32>
    %17 = arith.mulf %6, %16 : vector<8x128xf32>
    %c0_5 = arith.constant 0 : index
    %c0_6 = arith.constant 0 : index
    %18 = vector.load %arg3[%c0_5, %c0_6] : memref<8x128xf32, #tpu.memory_space<vmem>>, vector<8x128xf32>
    tpu.vector_store %arg3[%c0_5, %c0_6], %17 {strides = array<i32>} : memref<8x128xf32, #tpu.memory_space<vmem>>, vector<8x128xf32>,
    return
  }
  func.func @transform_0(%arg0: i32) -> i32 {
    %c0_i32 = arith.constant 0 : i32
    %c0_i32_0 = arith.constant 0 : i32
    return %c0_i32 : i32
  }
  func.func @transform_1(%arg0: i32) -> (i32, i32) {
    %c0_i32 = arith.constant 0 : i32
    %c0_i32_0 = arith.constant 0 : i32
    return %arg0, %c0_i32 : i32, i32
  }
  func.func @transform_2(%arg0: i32) -> (i32, i32) {
    %c0_i32 = arith.constant 0 : i32
    %c0_i32_0 = arith.constant 0 : i32
    return %arg0, %c0_i32 : i32, i32
  }
}

</mosaic_0001>

<llo_original>
// kernel: layer_normalization.1
$region0: #{layer_normalization.1}
  #allocation0 [shape = 'u32[]', space=smem, size = 0x4, offset = 0x4, fixed_abs, tag = 'smem constant byte address 0x4 - core index']
  #allocation1 [shape = 'u32[144,128]{1,0:T(1,128)}', space=vmem, size = 0x12000, scoped, tag = 'internal scratch']
  #allocation2 [shape = 'f32[1]{0:T(128)S(6)}', space=smem, size = 0x200, scoped, tag = 'scoped memory for layer_normalization.1']
  %s0 = inlined_call_operand.<no memory space> [shape: f32[1], index: 0, kind: input, shape index: {}]
  %s1 = inlined_call_operand.hbm [shape: f32[16,128], index: 1, kind: input, shape index: {}]
  %s2 = inlined_call_operand.hbm [shape: f32[16,128], index: 2, kind: output, shape index: {}]
  %s3 = sld [smem:[#allocation0]]
  $region45: #{layer_normalization.1} parent=0
    _
  %s5 = ssub.s32 1, %s3
  %s6 = scalar_select 0, %s5, %s3
  %7 = sst [smem:[#allocation2]] %s0
  $region1: #{layer_normalization.1} parent=0
    #allocation3 [shape = 'u8[8192]{0}', space=vmem, size = 0x2000, scoped, tag = 'input window, operand 1']
    #allocation4 [shape = 's32[2]{0}', space=sflag, size = 0x8, scoped, tag = 'scoped memory for layer_normalization.1']
    #allocation5 [shape = 's32[2]{0}', space=sflag, size = 0x8, scoped, tag = 'scoped memory for layer_normalization.1']
    #allocation6 [shape = 'u8[8192]{0}', space=vmem, size = 0x2000, scoped, tag = 'output window, operand 0']
    %8 = vsyncpa [#allocation4], 0
    %s9 = scalar_lea.sflag [#allocation4], 1
    %10 = vsyncpa %s9, 0
    %11 = vsyncpa [#allocation5], 0
    %s12 = scalar_lea.sflag [#allocation5], 1
    %13 = vsyncpa %s12, 0
    loop: start=0, step=1, limit=4
    $region2: #{layer_normalization.1} parent=1 // loop_pre_header
      _
    $region3: #{layer_normalization.1} parent=1 // loop_header
      %s15 = sphi 0, %s19
      %p16 = scmp.ge.s32.totalorder %s15, 4
      %s23 = sphi 0, %s23
      %s25 = sphi 0, %s23
      %s26 = sphi 0, %s25
      %s40 = sphi 0, %s26
      %s46 = sphi 0, %s48
      %s49 = sphi 0, %s46
      %s50 = sphi 0, %s49
      %s66 = sphi 0, %s50
      %s72 = sphi 0, %s74
      %s75 = sphi 0, %s72
      %s76 = sphi 0, %s75
      %s92 = sphi 0, %s76
    $region4: #{layer_normalization.1} parent=1 // loop_header_branch
      %18 = sbr.rel (%p16) target = $region8
    $region5: #{layer_normalization.1} parent=1 // loop_body
      %s20 = ssub.s32 %s15, 1
      %s21 = ssub.s32 %s15, 2
      %s22 = sadd.s32 %s15, 1
      %s24 = sadd.s32 %s23, 1
      %p27 = scmp.eq.s32.totalorder %s15, 1
      %p28 = scmp.ne.s32.totalorder %s23, %s25
      %p29 = scmp.eq.s32.totalorder %s15, 0
      %p30 = por %p28, %p29
      %p31 = scmp.ne.s32.totalorder %s23, %s25
      %p32 = scmp.eq.s32.totalorder %s20, 1
      %p33 = por %p31, %p32
      %p34 = scmp.ne.s32.totalorder %s25, %s26
      %p35 = scmp.eq.s32.totalorder %s20, 0
      %p36 = por %p34, %p35
      %p37 = scmp.ne.s32.totalorder %s25, %s26
      %p38 = scmp.eq.s32.totalorder %s21, 1
      %p39 = por %p37, %p38
      %p41 = scmp.ne.s32.totalorder %s26, %s40
      %p42 = scmp.eq.s32.totalorder %s21, 0
      %p43 = por %p41, %p42
      %s44 = ssub.s32 %s15, %s22
      %p45 = scmp.eq.s32.totalorder %s44, 0
      %s47 = sadd.s32 %s46, 1
      %s48 = scalar_select %p45, %s46, %s47
      %p51 = pneg %p45
      %p52 = scmp.eq.s32.totalorder %s15, 1
      %p53 = por %p51, %p52
      %p54 = scmp.ne.s32.totalorder %s46, %s49
      %p55 = scmp.eq.s32.totalorder %s15, 0
      %p56 = por %p54, %p55
      %p57 = scmp.ne.s32.totalorder %s46, %s49
      %p58 = scmp.eq.s32.totalorder %s20, 1
      %p59 = por %p57, %p58
      %p60 = scmp.ne.s32.totalorder %s49, %s50
      %p61 = scmp.eq.s32.totalorder %s20, 0
      %p62 = por %p60, %p61
      %p63 = scmp.ne.s32.totalorder %s49, %s50
      %p64 = scmp.eq.s32.totalorder %s21, 1
      %p65 = por %p63, %p64
      %p67 = scmp.ne.s32.totalorder %s50, %s66
      %p68 = scmp.eq.s32.totalorder %s21, 0
      %p69 = por %p67, %p68
      %s70 = ssub.s32 %s15, %s22
      %p71 = scmp.eq.s32.totalorder %s70, 0
      %s73 = sadd.s32 %s72, 1
      %s74 = scalar_select %p71, %s72, %s73
      %p77 = pneg %p71
      %p78 = scmp.eq.s32.totalorder %s15, 1
      %p79 = por %p77, %p78
      %p80 = scmp.ne.s32.totalorder %s72, %s75
      %p81 = scmp.eq.s32.totalorder %s15, 0
      %p82 = por %p80, %p81
      %p83 = scmp.ne.s32.totalorder %s72, %s75
      %p84 = scmp.eq.s32.totalorder %s20, 1
      %p85 = por %p83, %p84
      %p86 = scmp.ne.s32.totalorder %s75, %s76
      %p87 = scmp.eq.s32.totalorder %s20, 0
      %p88 = por %p86, %p87
      %p89 = scmp.ne.s32.totalorder %s75, %s76
      %p90 = scmp.eq.s32.totalorder %s21, 1
      %p91 = por %p89, %p90
      %p93 = scmp.ne.s32.totalorder %s76, %s92
      %p94 = scmp.eq.s32.totalorder %s21, 0
      %p95 = por %p93, %p94
      %p96 = scmp.le.s32.totalorder 1, %s15
      %p97 = scmp.lt.s32.totalorder %s15, 3
      %p98 = pnand %p96, %p97
      %p99 = pneg %p98
      // Predicated region
      $region9: #{layer_normalization.1} parent=5 // pred_check
        _
      $region10: #{layer_normalization.1} parent=5 // pred_check_branch
        %101 = sbr.rel (%p98) target = $region12
      $region11: #{layer_normalization.1} parent=5 // pred_region
        %s102 = ssub.s32 %s15, 1
        // Predicated region
        $region13: #{layer_normalization.1} parent=11 // pred_check
          %p103 = pneg %p36
        $region14: #{layer_normalization.1} parent=11 // pred_check_branch
          %105 = sbr.rel (%p103) target = $region16
        $region15: #{layer_normalization.1} parent=11 // pred_region
          _
        $region16: #{layer_normalization.1} parent=11 // pred_fallthru
          _
      $region12: #{layer_normalization.1} parent=5 // pred_fallthru
        _
      %p106 = scmp.lt.s32.totalorder %s15, 2
      // Predicated region
      $region17: #{layer_normalization.1} parent=5 // pred_check
        %p107 = pneg %p106
      $region18: #{layer_normalization.1} parent=5 // pred_check_branch
        %109 = sbr.rel (%p107) target = $region20
      $region19: #{layer_normalization.1} parent=5 // pred_region
        // Predicated region
        $region21: #{layer_normalization.1} parent=19 // pred_check
          %p110 = pneg %p56
        $region22: #{layer_normalization.1} parent=19 // pred_check_branch
          %112 = sbr.rel (%p110) target = $region24
        $region23: #{layer_normalization.1} parent=19 // pred_region
          %s113 = sand.u32 %s46, 1
          %s114 = scalar_lea.sflag [#allocation4], %s113
          %s115 = sand.u32 %s46, 1
          %s116 = smul.addr %s115, 8
          %s117 = scalar_lea.vmem [#allocation3], %s116
          %s119 = ssub.s32 128, 128
          %120 = vsyncadd %s114, %s119
          %s121 = smul.addr %s15, 128
          %s122 = scalar_lea.hbm %s1, %s121
          %s124 = sshll.u32 %s117, 4
          %s125 = int_to_ptr.vmem [resolvable:$true] %s124
          %127 = dma.hbm_to_vmem [thread:$0]  %s122, 128, %s125, %s114
        $region24: #{layer_normalization.1} parent=19 // pred_fallthru
          _
      $region20: #{layer_normalization.1} parent=5 // pred_fallthru
        _
      %p128 = scmp.le.s32.totalorder 1, %s15
      %p129 = scmp.lt.s32.totalorder %s15, 3
      %p130 = pnand %p128, %p129
      %p131 = pneg %p130
      // Predicated region
      $region25: #{layer_normalization.1} parent=5 // pred_check
        _
      $region26: #{layer_normalization.1} parent=5 // pred_check_branch
        %133 = sbr.rel (%p130) target = $region28
      $region27: #{layer_normalization.1} parent=5 // pred_region
        %s134 = ssub.s32 %s15, 1
        %s135 = sand.u32 %s49, 1
        %s136 = scalar_lea.sflag [#allocation4], %s135
        %s137 = sand.u32 %s49, 1
        %s138 = smul.addr %s137, 8
        %s139 = scalar_lea.vmem [#allocation3], %s138
        // Predicated region
        $region29: #{layer_normalization.1} parent=27 // pred_check
          %p140 = pneg %p62
        $region30: #{layer_normalization.1} parent=27 // pred_check_branch
          %142 = sbr.rel (%p140) target = $region32
        $region31: #{layer_normalization.1} parent=27 // pred_region
          %143 = dma.done %s136, 128
        $region32: #{layer_normalization.1} parent=27 // pred_fallthru
          _
        %p144 = pneg %p36
        %p145 = pneg %p33
        %s146 = sand.u32 %s49, 1
        %s147 = scalar_lea.sflag [#allocation4], %s146
        %s148 = sand.u32 %s49, 1
        %s149 = smul.addr %s148, 8
        %s150 = scalar_lea.vmem [#allocation3], %s149
        %p151 = pneg %p62
        %p152 = pneg %p59
        %p153 = pneg %p88
        %p154 = pneg %p85
        %s155 = sand.u32 %s75, 1
        %s156 = scalar_lea.sflag [#allocation5], %s155
        %s157 = sand.u32 %s75, 1
        %s158 = smul.addr %s157, 8
        %s159 = scalar_lea.vmem [#allocation6], %s158
        %v160 = vld [vmem:[%s139] sm:$0xff]
        %161 = vadd.xlane.f32.xlu0 %v160
        %v162 = vpop.xlane.xlu0 %161
        %v163 = vrcp.pop 128.0
        %v164 = vmul.f32 %v162, %v163
        %v165 = vsub.f32 %v160, %v164
        %v166 = vmul.f32 %v165, %v165
        %167 = vadd.xlane.f32.xlu0 %v166
        %v168 = vpop.xlane.xlu0 %167
        %v169 = vmul.f32 %v168, 0.007874016
        %v170 = vrsqrt.pop %v169
        %s171 = sld [smem:[#allocation2]]
        %v172 = vstv %s171
        %v173 = vmul.f32 %v172, %v170
        %v174 = vmul.f32 %v165, %v173
        %175 = vst [vmem:[%s159] sm:$0xff] %v174
        %s176 = sand.u32 %s75, 1
        %s177 = scalar_lea.sflag [#allocation5], %s176
        %s178 = sand.u32 %s75, 1
        %s179 = smul.addr %s178, 8
        %s180 = scalar_lea.vmem [#allocation6], %s179
        // Predicated region
        $region33: #{layer_normalization.1} parent=27 // pred_check
          %p181 = pneg %p85
        $region34: #{layer_normalization.1} parent=27 // pred_check_branch
          %183 = sbr.rel (%p181) target = $region36
        $region35: #{layer_normalization.1} parent=27 // pred_region
          %s185 = ssub.s32 128, 128
          %186 = vsyncadd %s177, %s185
          %s187 = smul.addr %s20, 128
          %s188 = scalar_lea.hbm %s2, %s187
          %s190 = sshll.u32 %s180, 4
          %s191 = int_to_ptr.vmem [resolvable:$true] %s190
          %193 = dma.vmem_to_hbm [thread:$0]  %s191, 128, %s188, %s177
        $region36: #{layer_normalization.1} parent=27 // pred_fallthru
          _
      $region28: #{layer_normalization.1} parent=5 // pred_fallthru
        _
      %p194 = scmp.le.s32.totalorder 2, %s15
      // Predicated region
      $region37: #{layer_normalization.1} parent=5 // pred_check
        %p195 = pneg %p194
      $region38: #{layer_normalization.1} parent=5 // pred_check_branch
        %197 = sbr.rel (%p195) target = $region40
      $region39: #{layer_normalization.1} parent=5 // pred_region
        %s198 = ssub.s32 %s15, 2
        // Predicated region
        $region41: #{layer_normalization.1} parent=39 // pred_check
          %p199 = pneg %p91
        $region42: #{layer_normalization.1} parent=39 // pred_check_branch
          %201 = sbr.rel (%p199) target = $region44
        $region43: #{layer_normalization.1} parent=39 // pred_region
          %s202 = sand.u32 %s76, 1
          %s203 = scalar_lea.sflag [#allocation5], %s202
          %s204 = sand.u32 %s76, 1
          %s205 = smul.addr %s204, 8
          %s206 = scalar_lea.vmem [#allocation6], %s205
          %207 = dma.done %s203, 128
        $region44: #{layer_normalization.1} parent=39 // pred_fallthru
          _
      $region40: #{layer_normalization.1} parent=5 // pred_fallthru
        _
    $region6: #{layer_normalization.1} parent=1 // loop_footer
      %s19 = sadd.s32 1, %s15
    $region7: #{layer_normalization.1} parent=1 // loop_footer_branch
      %14 = sbr.rel target = $region3
    $region8: #{layer_normalization.1} parent=1 // loop_exit
      _
    %208 = vsyncpa [#allocation4], 1
    %s209 = scalar_lea.sflag [#allocation4], 1
    %210 = vsyncpa %s209, 1
    %211 = vsyncpa [#allocation5], 1
    %s212 = scalar_lea.sflag [#allocation5], 1
    %213 = vsyncpa %s212, 1

</llo_original>
